<compile_context>
chip_gen: v7x
topology: tpu7x:2x2x1
jax: 0.10.0
libtpu: 0.0.40
codegen_flags: <defaults>
</compile_context>

<pallas_src>
import math

import jax
import jax.numpy as jnp
from jax import lax
from jax.experimental import pallas as pl
from jax.experimental.pallas import tpu as pltpu

NEG_SLOPE = 0.01        # F.leaky_relu default negative slope
_NEG_BIG = -1e30        # finite "masked" score (avoids inf - inf NaNs in online softmax)
_LANE = 128
_SUBLANE = 8


def _round_up(x, m):
    return ((x + m - 1) // m) * m


def _shrink_tile(t, n, unit):
    """Halve tile `t` until it no longer exceeds n rounded up to `unit`."""
    n_up = _round_up(max(n, 1), unit)
    while t > n_up and t >= 2 * unit:
        t //= 2
    return _round_up(t, unit)


# ----------------------------------------------------------------------------
# Kernel 1: node feature projection  z = h @ W^T   (tiled over node rows, bf16 out)
# ----------------------------------------------------------------------------
def _fc_kernel(h_ref, wT_ref, z_ref):
    z_ref[...] = jnp.dot(h_ref[...], wT_ref[...],
                         preferred_element_type=jnp.float32).astype(z_ref.dtype)


# ----------------------------------------------------------------------------
# Kernel 2: masked edge attention, online softmax over src blocks, aggregation.
#   grid = (dst_tiles, src_blocks); src axis is the reduction ("arbitrary").
# ----------------------------------------------------------------------------
def _gat_attn_kernel(er_ref, el_ref, adj_ref, z_ref, out_ref, m_sc, l_sc, acc_sc):
    k = pl.program_id(1)

    @pl.when(k == 0)
    def _():
        m_sc[...] = jnp.full_like(m_sc, _NEG_BIG)
        l_sc[...] = jnp.zeros_like(l_sc)
        acc_sc[...] = jnp.zeros_like(acc_sc)

    # e[i, j] = leaky_relu(er_i + el_j) for this (dst-tile, src-block)
    s = er_ref[...] + el_ref[...]                       # (tm,1)+(1,tk) -> (tm,tk) f32
    s = jnp.maximum(s, NEG_SLOPE * s)                   # leaky_relu
    mask = adj_ref[...] != 0                            # int8 {0,1} -> bool
    s = jnp.where(mask, s, _NEG_BIG)

    # Online (flash-style) softmax update over the src axis.
    m_prev = m_sc[...]
    m_new = jnp.maximum(m_prev, jnp.max(s, axis=-1, keepdims=True))
    corr = jnp.exp(m_prev - m_new)
    # TODO(synk): on v6e/v7x the exp could take bf16 inputs for higher EUP throughput;
    #             kept f32 so the same kernel is exact on v5e (no bf16 EUP/VPU).
    p = jnp.where(mask, jnp.exp(s - m_new), 0.0)        # post-exp mask: isolated rows stay 0
    l_sc[...] = corr * l_sc[...] + jnp.sum(p, axis=-1, keepdims=True)
    acc_sc[...] = corr * acc_sc[...] + jnp.dot(
        p.astype(z_ref.dtype), z_ref[...], preferred_element_type=jnp.float32)
    m_sc[...] = m_new

    @pl.when(k == pl.num_programs(1) - 1)
    def _():
        denom = jnp.maximum(l_sc[...], 1e-20)           # isolated / padded dst rows -> 0
        inv = pl.reciprocal(denom, approx=True)
        inv = inv * (2.0 - denom * inv)                 # one Newton refinement step
        out_ref[...] = (acc_sc[...] * inv).astype(out_ref.dtype)


# ----------------------------------------------------------------------------
# Wrapper
# ----------------------------------------------------------------------------
def gat_forward(h, W_fc, a_attn, adj, *, tile_m=256, tile_k=512):
    """h: [N, in_dim], W_fc: [out_dim, in_dim], a_attn: [1, 2*out_dim], adj: [N, N]."""
    h = jnp.asarray(h, jnp.float32)
    W_fc = jnp.asarray(W_fc, jnp.float32)
    a_attn = jnp.asarray(a_attn, jnp.float32)

    N, in_dim = h.shape
    out_dim = W_fc.shape[0]

    in_pad = _round_up(in_dim, _LANE)
    d_pad = _round_up(out_dim, _LANE)

    tm = _shrink_tile(tile_m, N, _SUBLANE)   # dst-row tile
    tk = _shrink_tile(tile_k, N, _LANE)      # src-column block
    n_pad = _round_up(N, math.lcm(tm, tk))
    n_dst = n_pad // tm
    n_src = n_pad // tk

    # Lane-dense zero-padded operands; adjacency as int8 (4x less HBM/VMEM than f32).
    h_p = jnp.zeros((n_pad, in_pad), jnp.float32).at[:N, :in_dim].set(h)
    wT_p = jnp.zeros((in_pad, d_pad), jnp.float32).at[:in_dim, :out_dim].set(W_fc.T)
    adj_i8 = jnp.zeros((n_pad, n_pad), jnp.int8).at[:N, :N].set(
        (jnp.asarray(adj) > 0).astype(jnp.int8))

    # Per-node attention logits, computed ONCE in f32 (attention vector folded into W),
    # instead of two <1% MXU-utilization matvecs recomputed in every attention grid step.
    a_src = a_attn[0, :out_dim]
    a_dst = a_attn[0, out_dim:]
    el = h @ (W_fc.T @ a_src)                 # [N]  el_j = a_src . z_j
    er = h @ (W_fc.T @ a_dst)                 # [N]  er_i = a_dst . z_i
    el_row = jnp.zeros((1, n_pad), jnp.float32).at[0, :N].set(el)
    er_col = jnp.zeros((n_pad, 1), jnp.float32).at[:N, 0].set(er)

    params_fc = pltpu.CompilerParams(
        dimension_semantics=("parallel",), vmem_limit_bytes=32 << 20)
    params_attn = pltpu.CompilerParams(
        dimension_semantics=("parallel", "arbitrary"), vmem_limit_bytes=32 << 20)

    # ---- projection: z = h @ W^T  (bf16 output halves z HBM traffic / VMEM) ----
    z_p = pl.pallas_call(
        _fc_kernel,
        out_shape=jax.ShapeDtypeStruct((n_pad, d_pad), jnp.bfloat16),
        grid=(n_dst,),
        in_specs=[
            pl.BlockSpec((tm, in_pad), lambda i: (i, 0)),
            pl.BlockSpec((in_pad, d_pad), lambda i: (0, 0)),
        ],
        out_specs=pl.BlockSpec((tm, d_pad), lambda i: (i, 0)),
        compiler_params=params_fc,
    )(h_p, wT_p)

    # ---- masked attention + online softmax + aggregation --------------------
    out_p = pl.pallas_call(
        _gat_attn_kernel,
        out_shape=jax.ShapeDtypeStruct((n_pad, d_pad), jnp.float32),
        grid=(n_dst, n_src),
        in_specs=[
            pl.BlockSpec((tm, 1), lambda i, k: (i, 0)),      # er column (this dst tile)
            pl.BlockSpec((1, tk), lambda i, k: (0, k)),      # el row (this src block)
            pl.BlockSpec((tm, tk), lambda i, k: (i, k)),     # int8 adjacency tile
            pl.BlockSpec((tk, d_pad), lambda i, k: (k, 0)),  # z src block (bf16)
        ],
        out_specs=pl.BlockSpec((tm, d_pad), lambda i, k: (i, 0)),
        scratch_shapes=[
            pltpu.VMEM((tm, 1), jnp.float32),     # running max m
            pltpu.VMEM((tm, 1), jnp.float32),     # running denom l
            pltpu.VMEM((tm, d_pad), jnp.float32)  # running accumulator
        ],
        compiler_params=params_attn,
    )(er_col, el_row, adj_i8, z_p)

    return out_p[:N, :out_dim]


# ----------------------------------------------------------------------------
# Pure-JAX reference for validation
# ----------------------------------------------------------------------------
def gat_reference(h, W_fc, a_attn, adj):
    out_dim = W_fc.shape[0]
    hp = lax.Precision.HIGHEST
    z = jnp.dot(h, W_fc.T, precision=hp)
    a_src = a_attn[0, :out_dim]
    a_dst = a_attn[0, out_dim:]
    el = jnp.dot(z, a_src, precision=hp)
    er = jnp.dot(z, a_dst, precision=hp)
    e = er[:, None] + el[None, :]
    e = jnp.where(e >= 0, e, NEG_SLOPE * e)
    masked = jnp.where(adj > 0, e, -jnp.inf)
    alpha = jax.nn.softmax(masked, axis=-1)
    alpha = jnp.where(adj > 0, alpha, 0.0)
    return jnp.dot(alpha, z, precision=hp)


if __name__ == "__main__":
    # Small shapes, but large enough to exercise multi-tile grids on BOTH the
    # dst-row axis and the src (online-softmax) axis.
    N, IN_DIM, OUT_DIM = 384, 16, 32

    key = jax.random.PRNGKey(0)
    k_h, k_w, k_a, k_adj = jax.random.split(key, 4)

    # Parameter shapes from __init__:
    #   fc:      nn.Linear(in_dim, out_dim, bias=False)  -> W_fc   [out_dim, in_dim]
    #   attn_fc: nn.Linear(2*out_dim, 1,   bias=False)   -> a_attn [1, 2*out_dim]
    h = jax.random.normal(k_h, (N, IN_DIM), dtype=jnp.float32)
    W_fc = jax.random.normal(k_w, (OUT_DIM, IN_DIM), dtype=jnp.float32) * 0.1
    a_attn = jax.random.normal(k_a, (1, 2 * OUT_DIM), dtype=jnp.float32) * 0.1

    # Deterministic random graph with self-loops (adj[dst, src] = 1 iff edge src->dst).
    adj = (jax.random.uniform(k_adj, (N, N)) < 0.05).astype(jnp.float32)
    adj = jnp.maximum(adj, jnp.eye(N, dtype=jnp.float32))

    ref = gat_reference(h, W_fc, a_attn, adj)

    # Default (production) tiles and small tiles that force >=2 tiles on both grid axes.
    # Tolerance is relaxed vs the f32-only version because z / alpha are bf16 in the
    # aggregation matmul (scores stay f32); expected error is ~2e-3.
    for tm_, tk_ in ((256, 512), (128, 256)):
        out = gat_forward(h, W_fc, a_attn, adj, tile_m=tm_, tile_k=tk_)
        out = jax.block_until_ready(out)
        assert out.shape == (N, OUT_DIM)
        assert jnp.allclose(out, ref, atol=2e-2, rtol=2e-2), (
            f"Pallas GAT mismatch vs JAX reference (tiles {tm_}x{tk_})")

    print("KERNEL_OK")
</pallas_src>

<mosaic_0001>
module attributes {stable_mosaic.version = 11 : i64} {
  func.func @_fc_kernel(%arg0: i32, %arg1: memref<256x128xf32, #tpu.memory_space<vmem>>, %arg2: memref<128x128xf32, #tpu.memory_space<vmem>>, %arg3: memref<256x128xbf16, #tpu.memory_space<vmem>>) attributes {dimension_semantics = [#tpu.dimension_semantics<parallel>], iteration_bounds = array<i64: 2>, scalar_prefetch = 0 : i64, scratch_operands = 0 : i64, tpu.core_type = #tpu.core_type<tc>, window_params = [{transform_indices = @transform_0, window_bounds = array<i64: 256, 128>}, {pipeline_mode = #tpu.pipeline_mode<synchronous>, transform_indices = @transform_1, window_bounds = array<i64: 128, 128>}, {transform_indices = @transform_2, window_bounds = array<i64: 256, 128>}]} {
    %c0 = arith.constant 0 : index
    %c0_0 = arith.constant 0 : index
    %0 = vector.load %arg1[%c0, %c0_0] : memref<256x128xf32, #tpu.memory_space<vmem>>, vector<256x128xf32>
    %c0_1 = arith.constant 0 : index
    %c0_2 = arith.constant 0 : index
    %1 = vector.load %arg2[%c0_1, %c0_2] : memref<128x128xf32, #tpu.memory_space<vmem>>, vector<128x128xf32>
    %cst = arith.constant dense<0.000000e+00> : vector<256x128xf32>
    %2 = tpu.matmul %0, %1, %cst {dimension_numbers = #tpu.dot_dimension_numbers<[1], [0], [0], [1], [0, 0, 1, 1], [], []>} : vector<256x128xf32>, vector<128x128xf32>, vector<256x128xf32> -> vector<256x128xf32>
    %3 = arith.truncf %2 : vector<256x128xf32> to vector<256x128xbf16>
    %c0_3 = arith.constant 0 : index
    %c0_4 = arith.constant 0 : index
    %4 = vector.load %arg3[%c0_3, %c0_4] : memref<256x128xbf16, #tpu.memory_space<vmem>>, vector<256x128xbf16>
    tpu.vector_store %arg3[%c0_3, %c0_4], %3 {strides = array<i32>} : memref<256x128xbf16, #tpu.memory_space<vmem>>, vector<256x128xbf16>,
    return
  }
  func.func @transform_0(%arg0: i32) -> (i32, i32) {
    %c0_i32 = arith.constant 0 : i32
    %c0_i32_0 = arith.constant 0 : i32
    return %arg0, %c0_i32 : i32, i32
  }
  func.func @transform_1(%arg0: i32) -> (i32, i32) {
    %c0_i32 = arith.constant 0 : i32
    %c0_i32_0 = arith.constant 0 : i32
    %c0_i32_1 = arith.constant 0 : i32
    return %c0_i32, %c0_i32_0 : i32, i32
  }
  func.func @transform_2(%arg0: i32) -> (i32, i32) {
    %c0_i32 = arith.constant 0 : i32
    %c0_i32_0 = arith.constant 0 : i32
    return %arg0, %c0_i32 : i32, i32
  }
}

</mosaic_0001>

<llo_original>
// kernel: tpu_custom_call.1
$region0: #{tpu_custom_call.1}
  #allocation0 [shape = 'u32[]', space=smem, size = 0x4, offset = 0x4, fixed_abs, tag = 'smem constant byte address 0x4 - core index']
  #allocation1 [shape = 'u32[144,128]{1,0:T(1,128)}', space=vmem, size = 0x12000, scoped, tag = 'internal scratch']
  %s0 = inlined_call_operand.hbm [shape: f32[512,128], index: 0, kind: input, shape index: {}]
  %s1 = inlined_call_operand.hbm [shape: f32[128,128], index: 1, kind: input, shape index: {}]
  %s2 = inlined_call_operand.hbm [shape: bf16[512,128], index: 2, kind: output, shape index: {}]
  %s3 = sld [smem:[#allocation0]]
  $region49: #{tpu_custom_call.1} parent=0
    _
  %s5 = ssub.s32 1, %s3
  %s6 = scalar_select 0, %s5, %s3
  $region1: #{tpu_custom_call.1} parent=0
    #allocation2 [shape = 'u8[262144]{0}', space=vmem, size = 0x40000, scoped, tag = 'input window, operand 0']
    #allocation3 [shape = 's32[2]{0}', space=sflag, size = 0x8, scoped, tag = 'scoped memory for tpu_custom_call.1']
    #allocation4 [shape = 's32[2]{0}', space=sflag, size = 0x8, scoped, tag = 'scoped memory for tpu_custom_call.1']
    #allocation5 [shape = 'u8[65536]{0}', space=vmem, size = 0x10000, scoped, tag = 'input window, operand 1, single buffered']
    #allocation6 [shape = 's32[1]{0}', space=sflag, size = 0x4, scoped, tag = 'scoped memory for tpu_custom_call.1']
    #allocation7 [shape = 'u8[131072]{0}', space=vmem, size = 0x20000, scoped, tag = 'output window, operand 0']
    %7 = vsyncpa [#allocation3], 0
    %s8 = scalar_lea.sflag [#allocation3], 1
    %9 = vsyncpa %s8, 0
    %10 = vsyncpa [#allocation6], 0
    %11 = vsyncpa [#allocation4], 0
    %s12 = scalar_lea.sflag [#allocation4], 1
    %13 = vsyncpa %s12, 0
    loop: start=0, step=1, limit=4
    $region2: #{tpu_custom_call.1} parent=1 // loop_pre_header
      _
    $region3: #{tpu_custom_call.1} parent=1 // loop_header
      %s15 = sphi 0, %s19
      %p16 = scmp.ge.s32.totalorder %s15, 4
      %s25 = sphi 0, %s27
      %s28 = sphi 0, %s25
      %s29 = sphi 0, %s28
      %s45 = sphi 0, %s29
      %s49 = sphi 0, %s49
      %s51 = sphi 0, %s49
      %s52 = sphi 0, %s51
      %s66 = sphi 0, %s52
      %s72 = sphi 0, %s74
      %s75 = sphi 0, %s72
      %s76 = sphi 0, %s75
      %s92 = sphi 0, %s76
    $region4: #{tpu_custom_call.1} parent=1 // loop_header_branch
      %18 = sbr.rel (%p16) target = $region8
    $region5: #{tpu_custom_call.1} parent=1 // loop_body
      %s20 = ssub.s32 %s15, 1
      %s21 = ssub.s32 %s15, 2
      %s22 = sadd.s32 %s15, 1
      %s23 = ssub.s32 %s15, %s22
      %p24 = scmp.eq.s32.totalorder %s23, 0
      %s26 = sadd.s32 %s25, 1
      %s27 = scalar_select %p24, %s25, %s26
      %p30 = pneg %p24
      %p31 = scmp.eq.s32.totalorder %s15, 1
      %p32 = por %p30, %p31
      %p33 = scmp.ne.s32.totalorder %s25, %s28
      %p34 = scmp.eq.s32.totalorder %s15, 0
      %p35 = por %p33, %p34
      %p36 = scmp.ne.s32.totalorder %s25, %s28
      %p37 = scmp.eq.s32.totalorder %s20, 1
      %p38 = por %p36, %p37
      %p39 = scmp.ne.s32.totalorder %s28, %s29
      %p40 = scmp.eq.s32.totalorder %s20, 0
      %p41 = por %p39, %p40
      %p42 = scmp.ne.s32.totalorder %s28, %s29
      %p43 = scmp.eq.s32.totalorder %s21, 1
      %p44 = por %p42, %p43
      %p46 = scmp.ne.s32.totalorder %s29, %s45
      %p47 = scmp.eq.s32.totalorder %s21, 0
      %p48 = por %p46, %p47
      %s50 = sadd.s32 %s49, 1
      %p53 = scmp.eq.s32.totalorder %s15, 1
      %p54 = scmp.ne.s32.totalorder %s49, %s51
      %p55 = scmp.eq.s32.totalorder %s15, 0
      %p56 = por %p54, %p55
      %p57 = scmp.ne.s32.totalorder %s49, %s51
      %p58 = scmp.eq.s32.totalorder %s20, 1
      %p59 = por %p57, %p58
      %p60 = scmp.ne.s32.totalorder %s51, %s52
      %p61 = scmp.eq.s32.totalorder %s20, 0
      %p62 = por %p60, %p61
      %p63 = scmp.ne.s32.totalorder %s51, %s52
      %p64 = scmp.eq.s32.totalorder %s21, 1
      %p65 = por %p63, %p64
      %p67 = scmp.ne.s32.totalorder %s52, %s66
      %p68 = scmp.eq.s32.totalorder %s21, 0
      %p69 = por %p67, %p68
      %s70 = ssub.s32 %s15, %s22
      %p71 = scmp.eq.s32.totalorder %s70, 0
      %s73 = sadd.s32 %s72, 1
      %s74 = scalar_select %p71, %s72, %s73
      %p77 = pneg %p71
      %p78 = scmp.eq.s32.totalorder %s15, 1
      %p79 = por %p77, %p78
      %p80 = scmp.ne.s32.totalorder %s72, %s75
      %p81 = scmp.eq.s32.totalorder %s15, 0
      %p82 = por %p80, %p81
      %p83 = scmp.ne.s32.totalorder %s72, %s75
      %p84 = scmp.eq.s32.totalorder %s20, 1
      %p85 = por %p83, %p84
      %p86 = scmp.ne.s32.totalorder %s75, %s76
      %p87 = scmp.eq.s32.totalorder %s20, 0
      %p88 = por %p86, %p87
      %p89 = scmp.ne.s32.totalorder %s75, %s76
      %p90 = scmp.eq.s32.totalorder %s21, 1
      %p91 = por %p89, %p90
      %p93 = scmp.ne.s32.totalorder %s76, %s92
      %p94 = scmp.eq.s32.totalorder %s21, 0
      %p95 = por %p93, %p94
      %p96 = scmp.le.s32.totalorder 1, %s15
      %p97 = scmp.lt.s32.totalorder %s15, 3
      %p98 = pnand %p96, %p97
      %p99 = pneg %p98
      // Predicated region
      $region9: #{tpu_custom_call.1} parent=5 // pred_check
        _
      $region10: #{tpu_custom_call.1} parent=5 // pred_check_branch
        %101 = sbr.rel (%p98) target = $region12
      $region11: #{tpu_custom_call.1} parent=5 // pred_region
        %s102 = ssub.s32 %s15, 1
        // Predicated region
        $region13: #{tpu_custom_call.1} parent=11 // pred_check
          %p103 = pneg %p62
        $region14: #{tpu_custom_call.1} parent=11 // pred_check_branch
          %105 = sbr.rel (%p103) target = $region16
        $region15: #{tpu_custom_call.1} parent=11 // pred_region
          %s107 = ssub.s32 2048, 2048
          %108 = vsyncadd [#allocation6], %s107
          %s109 = sshll.u32 [#allocation5], 4
          %s110 = int_to_ptr.vmem [resolvable:$true] %s109
          %115 = dma.hbm_to_vmem [thread:$0]  %s1, 2048, %s110, [#allocation6], 128, 128, 8
        $region16: #{tpu_custom_call.1} parent=11 // pred_fallthru
          _
      $region12: #{tpu_custom_call.1} parent=5 // pred_fallthru
        _
      %p116 = scmp.lt.s32.totalorder %s15, 2
      // Predicated region
      $region17: #{tpu_custom_call.1} parent=5 // pred_check
        %p117 = pneg %p116
      $region18: #{tpu_custom_call.1} parent=5 // pred_check_branch
        %119 = sbr.rel (%p117) target = $region20
      $region19: #{tpu_custom_call.1} parent=5 // pred_region
        // Predicated region
        $region21: #{tpu_custom_call.1} parent=19 // pred_check
          %p120 = pneg %p35
        $region22: #{tpu_custom_call.1} parent=19 // pred_check_branch
          %122 = sbr.rel (%p120) target = $region24
        $region23: #{tpu_custom_call.1} parent=19 // pred_region
          %s123 = sand.u32 %s25, 1
          %s124 = scalar_lea.sflag [#allocation3], %s123
          %s125 = sand.u32 %s25, 1
          %s126 = smul.addr %s125, 256
          %s127 = scalar_lea.vmem [#allocation2], %s126
          %s128 = smul.u32 32, %s15
          %s130 = ssub.s32 4096, 4096
          %131 = vsyncadd %s124, %s130
          %s132 = smul.addr %s128, 128
          %s133 = scalar_lea.hbm %s0, %s132
          %s134 = sshll.u32 %s127, 4
          %s135 = int_to_ptr.vmem [resolvable:$true] %s134
          %140 = dma.hbm_to_vmem [thread:$0]  %s133, 4096, %s135, %s124, 128, 128, 8
        $region24: #{tpu_custom_call.1} parent=19 // pred_fallthru
          _
      $region20: #{tpu_custom_call.1} parent=5 // pred_fallthru
        _
      %p141 = scmp.le.s32.totalorder 1, %s15
      %p142 = scmp.lt.s32.totalorder %s15, 3
      %p143 = pnand %p141, %p142
      %p144 = pneg %p143
      // Predicated region
      $region25: #{tpu_custom_call.1} parent=5 // pred_check
        _
      $region26: #{tpu_custom_call.1} parent=5 // pred_check_branch
        %146 = sbr.rel (%p143) target = $region28
      $region27: #{tpu_custom_call.1} parent=5 // pred_region
        %s147 = ssub.s32 %s15, 1
        %s148 = sand.u32 %s28, 1
        %s149 = scalar_lea.sflag [#allocation3], %s148
        %s150 = sand.u32 %s28, 1
        %s151 = smul.addr %s150, 256
        %s152 = scalar_lea.vmem [#allocation2], %s151
        // Predicated region
        $region29: #{tpu_custom_call.1} parent=27 // pred_check
          %p153 = pneg %p41
        $region30: #{tpu_custom_call.1} parent=27 // pred_check_branch
          %155 = sbr.rel (%p153) target = $region32
        $region31: #{tpu_custom_call.1} parent=27 // pred_region
          %156 = dma.done %s149, 4096
        $region32: #{tpu_custom_call.1} parent=27 // pred_fallthru
          _
        // Predicated region
        $region33: #{tpu_custom_call.1} parent=27 // pred_check
          %p157 = pneg %p62
        $region34: #{tpu_custom_call.1} parent=27 // pred_check_branch
          %159 = sbr.rel (%p157) target = $region36
        $region35: #{tpu_custom_call.1} parent=27 // pred_region
          %160 = dma.done [#allocation6], 2048
        $region36: #{tpu_custom_call.1} parent=27 // pred_fallthru
          _
        %s161 = sand.u32 %s28, 1
        %s162 = scalar_lea.sflag [#allocation3], %s161
        %s163 = sand.u32 %s28, 1
        %s164 = smul.addr %s163, 256
        %s165 = scalar_lea.vmem [#allocation2], %s164
        %p166 = pneg %p41
        %p167 = pneg %p38
        %p168 = pneg %p62
        %p169 = pneg %p59
        %p170 = pneg %p88
        %p171 = pneg %p85
        %s172 = sand.u32 %s75, 1
        %s173 = scalar_lea.sflag [#allocation4], %s172
        %s174 = sand.u32 %s75, 1
        %s175 = smul.addr %s174, 128
        %s176 = scalar_lea.vmem [#allocation7], %s175
        %s177 = smul.u32 32, %s20
        %s178 = smul.u32 32, %s20
        %v179 = vld [vmem:[%s152] sm:$0xff]
        %v180 = vld [vmem:[%s152 + $0x8] sm:$0xff]
        %v181 = vld [vmem:[%s152 + $0x10] sm:$0xff]
        %v182 = vld [vmem:[%s152 + $0x18] sm:$0xff]
        %v183 = vld [vmem:[%s152 + $0x20] sm:$0xff]
        %v184 = vld [vmem:[%s152 + $0x28] sm:$0xff]
        %v185 = vld [vmem:[%s152 + $0x30] sm:$0xff]
        %v186 = vld [vmem:[%s152 + $0x38] sm:$0xff]
        %v187 = vld [vmem:[%s152 + $0x40] sm:$0xff]
        %v188 = vld [vmem:[%s152 + $0x48] sm:$0xff]
        %v189 = vld [vmem:[%s152 + $0x50] sm:$0xff]
        %v190 = vld [vmem:[%s152 + $0x58] sm:$0xff]
        %v191 = vld [vmem:[%s152 + $0x60] sm:$0xff]
        %v192 = vld [vmem:[%s152 + $0x68] sm:$0xff]
        %v193 = vld [vmem:[%s152 + $0x70] sm:$0xff]
        %v194 = vld [vmem:[%s152 + $0x78] sm:$0xff]
        %v195 = vld [vmem:[%s152 + $0x80] sm:$0xff]
        %v196 = vld [vmem:[%s152 + $0x88] sm:$0xff]
        %v197 = vld [vmem:[%s152 + $0x90] sm:$0xff]
        %v198 = vld [vmem:[%s152 + $0x98] sm:$0xff]
        %v199 = vld [vmem:[%s152 + $0xa0] sm:$0xff]
        %v200 = vld [vmem:[%s152 + $0xa8] sm:$0xff]
        %v201 = vld [vmem:[%s152 + $0xb0] sm:$0xff]
        %v202 = vld [vmem:[%s152 + $0xb8] sm:$0xff]
        %v203 = vld [vmem:[%s152 + $0xc0] sm:$0xff]
        %v204 = vld [vmem:[%s152 + $0xc8] sm:$0xff]
        %v205 = vld [vmem:[%s152 + $0xd0] sm:$0xff]
        %v206 = vld [vmem:[%s152 + $0xd8] sm:$0xff]
        %v207 = vld [vmem:[%s152 + $0xe0] sm:$0xff]
        %v208 = vld [vmem:[%s152 + $0xe8] sm:$0xff]
        %v209 = vld [vmem:[%s152 + $0xf0] sm:$0xff]
        %v210 = vld [vmem:[%s152 + $0xf8] sm:$0xff]
        %v211 = vld [vmem:[#allocation5] sm:$0xff]
        %v212 = vld [vmem:[#allocation5 + $0x8] sm:$0xff]
        %v213 = vld [vmem:[#allocation5 + $0x10] sm:$0xff]
        %v214 = vld [vmem:[#allocation5 + $0x18] sm:$0xff]
        %v215 = vld [vmem:[#allocation5 + $0x20] sm:$0xff]
        %v216 = vld [vmem:[#allocation5 + $0x28] sm:$0xff]
        %v217 = vld [vmem:[#allocation5 + $0x30] sm:$0xff]
        %v218 = vld [vmem:[#allocation5 + $0x38] sm:$0xff]
        %v219 = vld [vmem:[#allocation5 + $0x40] sm:$0xff]
        %v220 = vld [vmem:[#allocation5 + $0x48] sm:$0xff]
        %v221 = vld [vmem:[#allocation5 + $0x50] sm:$0xff]
        %v222 = vld [vmem:[#allocation5 + $0x58] sm:$0xff]
        %v223 = vld [vmem:[#allocation5 + $0x60] sm:$0xff]
        %v224 = vld [vmem:[#allocation5 + $0x68] sm:$0xff]
        %v225 = vld [vmem:[#allocation5 + $0x70] sm:$0xff]
        %v226 = vld [vmem:[#allocation5 + $0x78] sm:$0xff]
        %227 = vmatprep.subr.mxu0 0.0
        %228 = vmatpush1.msra.mxu0 %v211
        %229 = vmatprep.subr.mxu0 0.0
        %230 = vmatpush1.msra.mxu0 %v212
        %231 = vmatprep.subr.mxu0 0.0
        %232 = vmatpush1.msra.mxu0 %v213
        %233 = vmatprep.subr.mxu0 0.0
        %234 = vmatpush1.msra.mxu0 %v214
        %235 = vmatprep.subr.mxu0 0.0
        %236 = vmatpush1.msra.mxu0 %v215
        %237 = vmatprep.subr.mxu0 0.0
        %238 = vmatpush1.msra.mxu0 %v216
        %239 = vmatprep.subr.mxu0 0.0
        %240 = vmatpush1.msra.mxu0 %v217
        %241 = vmatprep.subr.mxu0 0.0
        %242 = vmatpush1.msra.mxu0 %v218
        %243 = vmatprep.subr.mxu0 0.0
        %244 = vmatpush1.msra.mxu0 %v219
        %245 = vmatprep.subr.mxu0 0.0
        %246 = vmatpush1.msra.mxu0 %v220
        %247 = vmatprep.subr.mxu0 0.0
        %248 = vmatpush1.msra.mxu0 %v221
        %249 = vmatprep.subr.mxu0 0.0
        %250 = vmatpush1.msra.mxu0 %v222
        %251 = vmatprep.subr.mxu0 0.0
        %252 = vmatpush1.msra.mxu0 %v223
        %253 = vmatprep.subr.mxu0 0.0
        %254 = vmatpush1.msra.mxu0 %v224
        %255 = vmatprep.subr.mxu0 0.0
        %256 = vmatpush1.msra.mxu0 %v225
        %257 = vmatprep.subr.mxu0 0.0
        %258 = vmatpush1.msra.mxu0 %v226
        %259 = vmatprep.subr.mxu0 0.0
        %260 = vmatpush1.msra.mxu0 0.0
        %261 = vmatprep.subr.mxu0 0.0
        %262 = vmatpush1.msra.mxu0 0.0
        %263 = vmatprep.subr.mxu0 0.0
        %264 = vmatpush1.msra.mxu0 0.0
        %265 = vmatprep.subr.mxu0 0.0
        %266 = vmatpush1.msra.mxu0 0.0
        %267 = vmatprep.subr.mxu0 0.0
        %268 = vmatpush1.msra.mxu0 0.0
        %269 = vmatprep.subr.mxu0 0.0
        %270 = vmatpush1.msra.mxu0 0.0
        %271 = vmatprep.subr.mxu0 0.0
        %272 = vmatpush1.msra.mxu0 0.0
        %273 = vmatprep.subr.mxu0 0.0
        %274 = vmatpush1.msra.mxu0 0.0
        %275 = vmatprep.subr.mxu0 0.0
        %276 = vmatpush1.msra.mxu0 0.0
        %277 = vmatprep.subr.mxu0 0.0
        %278 = vmatpush1.msra.mxu0 0.0
        %279 = vmatprep.subr.mxu0 0.0
        %280 = vmatpush1.msra.mxu0 0.0
        %281 = vmatprep.subr.mxu0 0.0
        %282 = vmatpush1.msra.mxu0 0.0
        %283 = vmatprep.subr.mxu0 0.0
        %284 = vmatpush1.msra.mxu0 0.0
        %285 = vmatprep.subr.mxu0 0.0
        %286 = vmatpush1.msra.mxu0 0.0
        %287 = vmatprep.subr.mxu0 0.0
        %288 = vmatpush1.msra.mxu0 0.0
        %289 = vmatprep.subr.mxu0 0.0
        %290 = vmatpush1.msra.mxu0 0.0
        %291 = vmatprep.mubr.f32.mxu0 0.0
        %292 = vmatmul.mubr.f32.gmra.mrb[0].mxu0 %v179
        %v293 = vpop.f32.mrb[0].mxu0
        %v294 = vadd.f32 0.0, %v293
        %v295 = vpop.f32.mrb[0].mxu0
        %296 = vmatprep.mubr.f32.mxu0 0.0
        %297 = vmatmul.mubr.f32.gmra.mrb[0].mxu0 %v180
        %v298 = vpop.f32.mrb[0].mxu0
        %v299 = vadd.f32 0.0, %v298
        %v300 = vpop.f32.mrb[0].mxu0
        %301 = vmatprep.mubr.f32.mxu0 0.0
        %302 = vmatmul.mubr.f32.gmra.mrb[0].mxu0 %v181
        %v303 = vpop.f32.mrb[0].mxu0
        %v304 = vadd.f32 0.0, %v303
        %v305 = vpop.f32.mrb[0].mxu0
        %306 = vmatprep.mubr.f32.mxu0 0.0
        %307 = vmatmul.mubr.f32.gmra.mrb[0].mxu0 %v182
        %v308 = vpop.f32.mrb[0].mxu0
        %v309 = vadd.f32 0.0, %v308
        %v310 = vpop.f32.mrb[0].mxu0
        %311 = vmatprep.mubr.f32.mxu0 0.0
        %312 = vmatmul.mubr.f32.gmra.mrb[0].mxu0 %v183
        %v313 = vpop.f32.mrb[0].mxu0
        %v314 = vadd.f32 0.0, %v313
        %v315 = vpop.f32.mrb[0].mxu0
        %316 = vmatprep.mubr.f32.mxu0 0.0
        %317 = vmatmul.mubr.f32.gmra.mrb[0].mxu0 %v184
        %v318 = vpop.f32.mrb[0].mxu0
        %v319 = vadd.f32 0.0, %v318
        %v320 = vpop.f32.mrb[0].mxu0
        %321 = vmatprep.mubr.f32.mxu0 0.0
        %322 = vmatmul.mubr.f32.gmra.mrb[0].mxu0 %v185
        %v323 = vpop.f32.mrb[0].mxu0
        %v324 = vadd.f32 0.0, %v323
        %v325 = vpop.f32.mrb[0].mxu0
        %326 = vmatprep.mubr.f32.mxu0 0.0
        %327 = vmatmul.mubr.f32.gmra.mrb[0].mxu0 %v186
        %v328 = vpop.f32.mrb[0].mxu0
        %v329 = vadd.f32 0.0, %v328
        %v330 = vpop.f32.mrb[0].mxu0
        %331 = vmatprep.mubr.f32.mxu0 0.0
        %332 = vmatmul.mubr.f32.gmra.mrb[0].mxu0 %v187
        %v333 = vpop.f32.mrb[0].mxu0
        %v334 = vadd.f32 0.0, %v333
        %v335 = vpop.f32.mrb[0].mxu0
        %336 = vmatprep.mubr.f32.mxu0 0.0
        %337 = vmatmul.mubr.f32.gmra.mrb[0].mxu0 %v188
        %v338 = vpop.f32.mrb[0].mxu0
        %v339 = vadd.f32 0.0, %v338
        %v340 = vpop.f32.mrb[0].mxu0
        %341 = vmatprep.mubr.f32.mxu0 0.0
        %342 = vmatmul.mubr.f32.gmra.mrb[0].mxu0 %v189
        %v343 = vpop.f32.mrb[0].mxu0
        %v344 = vadd.f32 0.0, %v343
        %v345 = vpop.f32.mrb[0].mxu0
        %346 = vmatprep.mubr.f32.mxu0 0.0
        %347 = vmatmul.mubr.f32.gmra.mrb[0].mxu0 %v190
        %v348 = vpop.f32.mrb[0].mxu0
        %v349 = vadd.f32 0.0, %v348
        %v350 = vpop.f32.mrb[0].mxu0
        %351 = vmatprep.mubr.f32.mxu0 0.0
        %352 = vmatmul.mubr.f32.gmra.mrb[0].mxu0 %v191
        %v353 = vpop.f32.mrb[0].mxu0
        %v354 = vadd.f32 0.0, %v353
        %v355 = vpop.f32.mrb[0].mxu0
        %356 = vmatprep.mubr.f32.mxu0 0.0
        %357 = vmatmul.mubr.f32.gmra.mrb[0].mxu0 %v192
        %v358 = vpop.f32.mrb[0].mxu0
        %v359 = vadd.f32 0.0, %v358
        %v360 = vpop.f32.mrb[0].mxu0
        %361 = vmatprep.mubr.f32.mxu0 0.0
        %362 = vmatmul.mubr.f32.gmra.mrb[0].mxu0 %v193
        %v363 = vpop.f32.mrb[0].mxu0
        %v364 = vadd.f32 0.0, %v363
        %v365 = vpop.f32.mrb[0].mxu0
        %366 = vmatprep.mubr.f32.mxu0 0.0
        %367 = vmatmul.mubr.f32.gmra.mrb[0].mxu0 %v194
        %v368 = vpop.f32.mrb[0].mxu0
        %v369 = vadd.f32 0.0, %v368
        %v370 = vpop.f32.mrb[0].mxu0
        %371 = vmatprep.mubr.f32.mxu0 0.0
        %372 = vmatmul.mubr.f32.gmra.mrb[0].mxu0 %v195
        %v373 = vpop.f32.mrb[0].mxu0
        %v374 = vadd.f32 0.0, %v373
        %v375 = vpop.f32.mrb[0].mxu0
        %376 = vmatprep.mubr.f32.mxu0 0.0
        %377 = vmatmul.mubr.f32.gmra.mrb[0].mxu0 %v196
        %v378 = vpop.f32.mrb[0].mxu0
        %v379 = vadd.f32 0.0, %v378
        %v380 = vpop.f32.mrb[0].mxu0
        %381 = vmatprep.mubr.f32.mxu0 0.0
        %382 = vmatmul.mubr.f32.gmra.mrb[0].mxu0 %v197
        %v383 = vpop.f32.mrb[0].mxu0
        %v384 = vadd.f32 0.0, %v383
        %v385 = vpop.f32.mrb[0].mxu0
        %386 = vmatprep.mubr.f32.mxu0 0.0
        %387 = vmatmul.mubr.f32.gmra.mrb[0].mxu0 %v198
        %v388 = vpop.f32.mrb[0].mxu0
        %v389 = vadd.f32 0.0, %v388
        %v390 = vpop.f32.mrb[0].mxu0
        %391 = vmatprep.mubr.f32.mxu0 0.0
        %392 = vmatmul.mubr.f32.gmra.mrb[0].mxu0 %v199
        %v393 = vpop.f32.mrb[0].mxu0
        %v394 = vadd.f32 0.0, %v393
        %v395 = vpop.f32.mrb[0].mxu0
        %396 = vmatprep.mubr.f32.mxu0 0.0
        %397 = vmatmul.mubr.f32.gmra.mrb[0].mxu0 %v200
        %v398 = vpop.f32.mrb[0].mxu0
        %v399 = vadd.f32 0.0, %v398
        %v400 = vpop.f32.mrb[0].mxu0
        %401 = vmatprep.mubr.f32.mxu0 0.0
        %402 = vmatmul.mubr.f32.gmra.mrb[0].mxu0 %v201
        %v403 = vpop.f32.mrb[0].mxu0
        %v404 = vadd.f32 0.0, %v403
        %v405 = vpop.f32.mrb[0].mxu0
        %406 = vmatprep.mubr.f32.mxu0 0.0
        %407 = vmatmul.mubr.f32.gmra.mrb[0].mxu0 %v202
        %v408 = vpop.f32.mrb[0].mxu0
        %v409 = vadd.f32 0.0, %v408
        %v410 = vpop.f32.mrb[0].mxu0
        %411 = vmatprep.mubr.f32.mxu0 0.0
        %412 = vmatmul.mubr.f32.gmra.mrb[0].mxu0 %v203
        %v413 = vpop.f32.mrb[0].mxu0
        %v414 = vadd.f32 0.0, %v413
        %v415 = vpop.f32.mrb[0].mxu0
        %416 = vmatprep.mubr.f32.mxu0 0.0
        %417 = vmatmul.mubr.f32.gmra.mrb[0].mxu0 %v204
        %v418 = vpop.f32.mrb[0].mxu0
        %v419 = vadd.f32 0.0, %v418
        %v420 = vpop.f32.mrb[0].mxu0
        %421 = vmatprep.mubr.f32.mxu0 0.0
        %422 = vmatmul.mubr.f32.gmra.mrb[0].mxu0 %v205
        %v423 = vpop.f32.mrb[0].mxu0
        %v424 = vadd.f32 0.0, %v423
        %v425 = vpop.f32.mrb[0].mxu0
        %426 = vmatprep.mubr.f32.mxu0 0.0
        %427 = vmatmul.mubr.f32.gmra.mrb[0].mxu0 %v206
        %v428 = vpop.f32.mrb[0].mxu0
        %v429 = vadd.f32 0.0, %v428
        %v430 = vpop.f32.mrb[0].mxu0
        %431 = vmatprep.mubr.f32.mxu0 0.0
        %432 = vmatmul.mubr.f32.gmra.mrb[0].mxu0 %v207
        %v433 = vpop.f32.mrb[0].mxu0
        %v434 = vadd.f32 0.0, %v433
        %v435 = vpop.f32.mrb[0].mxu0
        %436 = vmatprep.mubr.f32.mxu0 0.0
        %437 = vmatmul.mubr.f32.gmra.mrb[0].mxu0 %v208
        %v438 = vpop.f32.mrb[0].mxu0
        %v439 = vadd.f32 0.0, %v438
        %v440 = vpop.f32.mrb[0].mxu0
        %441 = vmatprep.mubr.f32.mxu0 0.0
        %442 = vmatmul.mubr.f32.gmra.mrb[0].mxu0 %v209
        %v443 = vpop.f32.mrb[0].mxu0
        %v444 = vadd.f32 0.0, %v443
        %v445 = vpop.f32.mrb[0].mxu0
        %446 = vmatprep.mubr.f32.mxu0 0.0
        %447 = vmatmul.mubr.f32.gmra.mrb[0].mxu0 %v210
        %v448 = vpop.f32.mrb[0].mxu0
        %v449 = vadd.f32 0.0, %v448
        %v450 = vpop.f32.mrb[0].mxu0
        %451 = vdwg.mxu0
        %v452 = vpack.c.bf16 %v299, %v294
        %v453 = vpack.c.bf16 %v309, %v304
        %v454 = vpack.c.bf16 %v319, %v314
        %v455 = vpack.c.bf16 %v329, %v324
        %v456 = vpack.c.bf16 %v339, %v334
        %v457 = vpack.c.bf16 %v349, %v344
        %v458 = vpack.c.bf16 %v359, %v354
        %v459 = vpack.c.bf16 %v369, %v364
        %v460 = vpack.c.bf16 %v379, %v374
        %v461 = vpack.c.bf16 %v389, %v384
        %v462 = vpack.c.bf16 %v399, %v394
        %v463 = vpack.c.bf16 %v409, %v404
        %v464 = vpack.c.bf16 %v419, %v414
        %v465 = vpack.c.bf16 %v429, %v424
        %v466 = vpack.c.bf16 %v439, %v434
        %v467 = vpack.c.bf16 %v449, %v444
        %v484 = vunpack.c.l.b16 %v452
        %v485 = vunpack.c.h.b16 %v452
        %v486 = vunpack.c.l.b16 %v453
        %v487 = vunpack.c.h.b16 %v453
        %v488 = vunpack.c.l.b16 %v454
        %v489 = vunpack.c.h.b16 %v454
        %v490 = vunpack.c.l.b16 %v455
        %v491 = vunpack.c.h.b16 %v455
        %v492 = vunpack.c.l.b16 %v456
        %v493 = vunpack.c.h.b16 %v456
        %v494 = vunpack.c.l.b16 %v457
        %v495 = vunpack.c.h.b16 %v457
        %v496 = vunpack.c.l.b16 %v458
        %v497 = vunpack.c.h.b16 %v458
        %v498 = vunpack.c.l.b16 %v459
        %v499 = vunpack.c.h.b16 %v459
        %v500 = vunpack.c.l.b16 %v460
        %v501 = vunpack.c.h.b16 %v460
        %v502 = vunpack.c.l.b16 %v461
        %v503 = vunpack.c.h.b16 %v461
        %v504 = vunpack.c.l.b16 %v462
        %v505 = vunpack.c.h.b16 %v462
        %v506 = vunpack.c.l.b16 %v463
        %v507 = vunpack.c.h.b16 %v463
        %v508 = vunpack.c.l.b16 %v464
        %v509 = vunpack.c.h.b16 %v464
        %v510 = vunpack.c.l.b16 %v465
        %v511 = vunpack.c.h.b16 %v465
        %v512 = vunpack.c.l.b16 %v466
        %v513 = vunpack.c.h.b16 %v466
        %v514 = vunpack.c.l.b16 %v467
        %v515 = vunpack.c.h.b16 %v467
        %v516 = vpack.c.b16 %v484, %v484
        %v517 = vpack.c.b16 %v485, %v485
        %v518 = vpack.c.b16 %v486, %v486
        %v519 = vpack.c.b16 %v487, %v487
        %v520 = vpack.c.b16 %v488, %v488
        %v521 = vpack.c.b16 %v489, %v489
        %v522 = vpack.c.b16 %v490, %v490
        %v523 = vpack.c.b16 %v491, %v491
        %v524 = vpack.c.b16 %v492, %v492
        %v525 = vpack.c.b16 %v493, %v493
        %v526 = vpack.c.b16 %v494, %v494
        %v527 = vpack.c.b16 %v495, %v495
        %v528 = vpack.c.b16 %v496, %v496
        %v529 = vpack.c.b16 %v497, %v497
        %v530 = vpack.c.b16 %v498, %v498
        %v531 = vpack.c.b16 %v499, %v499
        %v532 = vpack.c.b16 %v500, %v500
        %v533 = vpack.c.b16 %v501, %v501
        %v534 = vpack.c.b16 %v502, %v502
        %v535 = vpack.c.b16 %v503, %v503
        %v536 = vpack.c.b16 %v504, %v504
        %v537 = vpack.c.b16 %v505, %v505
        %v538 = vpack.c.b16 %v506, %v506
        %v539 = vpack.c.b16 %v507, %v507
        %v540 = vpack.c.b16 %v508, %v508
        %v541 = vpack.c.b16 %v509, %v509
        %v542 = vpack.c.b16 %v510, %v510
        %v543 = vpack.c.b16 %v511, %v511
        %v544 = vpack.c.b16 %v512, %v512
        %v545 = vpack.c.b16 %v513, %v513
        %v546 = vpack.c.b16 %v514, %v514
        %v547 = vpack.c.b16 %v515, %v515
        %580 = vst [vmem:[%s176] sm:$0xf] %v516
        %581 = vst [vmem:[%s176 + $0x4] sm:$0xf] %v517
        %582 = vst [vmem:[%s176 + $0x8] sm:$0xf] %v518
        %583 = vst [vmem:[%s176 + $0xc] sm:$0xf] %v519
        %584 = vst [vmem:[%s176 + $0x10] sm:$0xf] %v520
        %585 = vst [vmem:[%s176 + $0x14] sm:$0xf] %v521
        %586 = vst [vmem:[%s176 + $0x18] sm:$0xf] %v522
        %587 = vst [vmem:[%s176 + $0x1c] sm:$0xf] %v523
        %588 = vst [vmem:[%s176 + $0x20] sm:$0xf] %v524
        %589 = vst [vmem:[%s176 + $0x24] sm:$0xf] %v525
        %590 = vst [vmem:[%s176 + $0x28] sm:$0xf] %v526
        %591 = vst [vmem:[%s176 + $0x2c] sm:$0xf] %v527
        %592 = vst [vmem:[%s176 + $0x30] sm:$0xf] %v528
        %593 = vst [vmem:[%s176 + $0x34] sm:$0xf] %v529
        %594 = vst [vmem:[%s176 + $0x38] sm:$0xf] %v530
        %595 = vst [vmem:[%s176 + $0x3c] sm:$0xf] %v531
        %596 = vst [vmem:[%s176 + $0x40] sm:$0xf] %v532
        %597 = vst [vmem:[%s176 + $0x44] sm:$0xf] %v533
        %598 = vst [vmem:[%s176 + $0x48] sm:$0xf] %v534
        %599 = vst [vmem:[%s176 + $0x4c] sm:$0xf] %v535
        %600 = vst [vmem:[%s176 + $0x50] sm:$0xf] %v536
        %601 = vst [vmem:[%s176 + $0x54] sm:$0xf] %v537
        %602 = vst [vmem:[%s176 + $0x58] sm:$0xf] %v538
        %603 = vst [vmem:[%s176 + $0x5c] sm:$0xf] %v539
        %604 = vst [vmem:[%s176 + $0x60] sm:$0xf] %v540
        %605 = vst [vmem:[%s176 + $0x64] sm:$0xf] %v541
        %606 = vst [vmem:[%s176 + $0x68] sm:$0xf] %v542
        %607 = vst [vmem:[%s176 + $0x6c] sm:$0xf] %v543
        %608 = vst [vmem:[%s176 + $0x70] sm:$0xf] %v544
        %609 = vst [vmem:[%s176 + $0x74] sm:$0xf] %v545
        %610 = vst [vmem:[%s176 + $0x78] sm:$0xf] %v546
        %611 = vst [vmem:[%s176 + $0x7c] sm:$0xf] %v547
        %s612 = sand.u32 %s75, 1
        %s613 = scalar_lea.sflag [#allocation4], %s612
        %s614 = sand.u32 %s75, 1
        %s615 = smul.addr %s614, 128
        %s616 = scalar_lea.vmem [#allocation7], %s615
        // Predicated region
        $region37: #{tpu_custom_call.1} parent=27 // pred_check
          %p617 = pneg %p85
        $region38: #{tpu_custom_call.1} parent=27 // pred_check_branch
          %619 = sbr.rel (%p617) target = $region40
        $region39: #{tpu_custom_call.1} parent=27 // pred_region
          %s620 = smul.u32 32, %s20
          %s622 = ssub.s32 2048, 2048
          %623 = vsyncadd %s613, %s622
          %s624 = smul.addr %s620, 64
          %s625 = scalar_lea.hbm %s2, %s624
          %s626 = sshll.u32 %s616, 4
          %s627 = int_to_ptr.vmem [resolvable:$true] %s626
          %632 = dma.vmem_to_hbm [thread:$0]  %s627, 2048, %s625, %s613, 64, 64, 4
        $region40: #{tpu_custom_call.1} parent=27 // pred_fallthru
          _
      $region28: #{tpu_custom_call.1} parent=5 // pred_fallthru
        _
      %p633 = scmp.le.s32.totalorder 2, %s15
      // Predicated region
      $region41: #{tpu_custom_call.1} parent=5 // pred_check
        %p634 = pneg %p633
      $region42: #{tpu_custom_call.1} parent=5 // pred_check_branch
        %636 = sbr.rel (%p634) target = $region44
      $region43: #{tpu_custom_call.1} parent=5 // pred_region
        %s637 = ssub.s32 %s15, 2
        // Predicated region
        $region45: #{tpu_custom_call.1} parent=43 // pred_check
          %p638 = pneg %p91
        $region46: #{tpu_custom_call.1} parent=43 // pred_check_branch
          %640 = sbr.rel (%p638) target = $region48
        $region47: #{tpu_custom_call.1} parent=43 // pred_region
          %s641 = sand.u32 %s76, 1
          %s642 = scalar_lea.sflag [#allocation4], %s641
          %s643 = sand.u32 %s76, 1
          %s644 = smul.addr %s643, 128
          %s645 = scalar_lea.vmem [#allocation7], %s644
          %646 = dma.done %s642, 2048
        $region48: #{tpu_custom_call.1} parent=43 // pred_fallthru
          _
      $region44: #{tpu_custom_call.1} parent=5 // pred_fallthru
        _
    $region6: #{tpu_custom_call.1} parent=1 // loop_footer
      %s19 = sadd.s32 1, %s15
    $region7: #{tpu_custom_call.1} parent=1 // loop_footer_branch
      %14 = sbr.rel target = $region3
    $region8: #{tpu_custom_call.1} parent=1 // loop_exit
      _
    %647 = vsyncpa [#allocation3], 1
    %s648 = scalar_lea.sflag [#allocation3], 1
    %649 = vsyncpa %s648, 1
    %650 = vsyncpa [#allocation6], 1
    %651 = vsyncpa [#allocation4], 1
    %s652 = scalar_lea.sflag [#allocation4], 1
    %653 = vsyncpa %s652, 1

</llo_original>
